<compile_context>
chip_gen: v7x
topology: tpu7x:2x2x1
jax: 0.10.0
libtpu: 0.0.40
codegen_flags: <defaults>
</compile_context>

<pallas_src>
import jax
import jax.numpy as jnp
from jax.experimental import pallas as pl
from jax.experimental.pallas import tpu as pltpu


def pointnet_conv_kernel(x_ref, w1_ref, b1_ref, w2_ref, b2_ref, o_ref):
    """x_ref: (tp, K*C0) f32; w1_ref: (K*C0, K*C1) bf16 block-diagonal; b1_ref: (1, K*C1) f32;
    w2_ref: (C1, C_out) bf16; b2_ref: (1, C_out) f32; o_ref: (tp, C_out) f32."""
    c1 = w2_ref.shape[0]
    k = w1_ref.shape[1] // c1          # number of neighbors (static)

    # Layer 1 for all K neighbors in a single lane-dense matmul (block-diagonal weight,
    # BN scale already folded in).  bf16 MXU inputs, f32 accumulation, shift + ReLU in f32.
    x = x_ref[...].astype(jnp.bfloat16)                              # in-kernel cast (VPU)
    h1 = jnp.dot(x, w1_ref[...], preferred_element_type=jnp.float32)  # (tp, K*C1)
    h1 = jnp.maximum(h1 + b1_ref[...], 0.0).astype(jnp.bfloat16)

    # Layer 2 per neighbor with a running max: never materializes a (K*tp, C_out) f32 slab.
    m = None
    for kk in range(k):
        hk = h1[:, kk * c1:(kk + 1) * c1]                            # (tp, C1) lane slice
        h2 = jnp.dot(hk, w2_ref[...], preferred_element_type=jnp.float32)
        h2 = jnp.maximum(h2 + b2_ref[...], 0.0)                      # (tp, C_out)
        m = h2 if m is None else jnp.maximum(m, h2)
    o_ref[...] = m.astype(o_ref.dtype)


def _round_up(x, n):
    return ((x + n - 1) // n) * n


def _pick_tp(m, max_tp=1024):
    """Rows (points) per grid step.  Multiple of 16 (bf16 sublane packing); multiple of 256
    once M is big enough (full MXU row passes per layer-2 dot); aims for >= 4 grid steps
    (2 TensorCores on v7x x >= 2 steps each); capped so the per-step VMEM stays small."""
    target = max(m // 4, 1)
    if target >= 256:
        tp = (target // 256) * 256
    else:
        tp = _round_up(target, 16)
    return int(min(max(tp, 16), max_tp))


def pointnet_conv(agg_feat, layer1, layer2, *, tp=None):
    """agg_feat: (M, K, C0) float32; layerN = (W (Cin, Cout), scale (1, Cout), shift (1, Cout))
    with BN already folded to an eval-mode scale/shift."""
    M, K, C0 = agg_feat.shape
    w1, s1, b1 = layer1
    w2, s2, b2 = layer2
    C1 = w1.shape[1]
    c_out = w2.shape[1]

    if tp is None:
        tp = _pick_tp(M)
    grid = pl.cdiv(M, tp)
    m_pad = grid * tp

    # Minor-dense input: (M, K, C0) -> (M, K*C0) is a free, contiguous reshape (no extra
    # HBM pass, unlike a transpose).  Pad M up to the tile grid; padded rows are garbage
    # but finite and are sliced off below.
    x = agg_feat.reshape(M, K * C0)
    if m_pad != M:
        x = jnp.pad(x, ((0, m_pad - M), (0, 0)))

    # Fold the BN scale into the conv weights in f32, then cast to bf16; only the additive
    # shift remains in the kernel.  Layer 1 is expanded to a block-diagonal (K*C0, K*C1)
    # weight so one matmul covers all K neighbors (contraction depth K*C0 instead of C0).
    w1f = w1.astype(jnp.float32) * s1.astype(jnp.float32)
    w1_blk = jnp.kron(jnp.eye(K, dtype=jnp.float32), w1f).astype(jnp.bfloat16)
    b1_tiled = jnp.tile(b1.astype(jnp.float32).reshape(1, C1), (1, K))       # (1, K*C1)
    w2f = (w2.astype(jnp.float32) * s2.astype(jnp.float32)).astype(jnp.bfloat16)
    b2f = b2.astype(jnp.float32).reshape(1, c_out)

    # Scoped VMEM limit from the actual (lane-padded, double-buffered) tile footprint,
    # clamped to 48 MiB (< v7x's 64 MiB physical per-core VMEM), never below the 32 MiB
    # v6e/v7x default.
    lane = lambda n: _round_up(n, 128)
    tile_bytes = (tp * lane(K * C0) * 4                      # x tile (f32)
                  + tp * lane(c_out) * 4                     # output tile (f32)
                  + lane(K * C0) * lane(K * C1) * 2          # w1 block-diagonal (bf16)
                  + lane(C1) * lane(c_out) * 2               # w2 (bf16)
                  + 8 * lane(K * C1) * 4 + 8 * lane(c_out) * 4)   # shifts (sublane-padded)
    vmem_limit = int(min(48 << 20, max(32 << 20, 4 * tile_bytes + (4 << 20))))

    full2d = lambda arr: pl.BlockSpec(arr.shape, lambda i: (0, 0))

    out = pl.pallas_call(
        pointnet_conv_kernel,
        out_shape=jax.ShapeDtypeStruct((m_pad, c_out), jnp.float32),
        grid_spec=pltpu.PrefetchScalarGridSpec(
            num_scalar_prefetch=0,
            grid=(grid,),
            in_specs=[
                pl.BlockSpec((tp, K * C0), lambda i: (i, 0)),   # contiguous HBM slab / step
                full2d(w1_blk), full2d(b1_tiled),
                full2d(w2f), full2d(b2f),
            ],
            out_specs=pl.BlockSpec((tp, c_out), lambda i: (i, 0)),
        ),
        compiler_params=pltpu.CompilerParams(
            dimension_semantics=("parallel",),
            vmem_limit_bytes=vmem_limit,
        ),
    )(x, w1_blk, b1_tiled, w2f, b2f)

    return out[:M]


def make_layer_params(key, c_in, c_out, eps=1e-5):
    """Deterministic Conv2d(1x1) + BatchNorm2d params, BN folded to scale/shift (eval mode)."""
    k_w, k_b, k_g, k_be, k_m, k_v = jax.random.split(key, 6)
    w = jax.random.normal(k_w, (c_in, c_out), jnp.float32) * (1.0 / jnp.sqrt(c_in))
    conv_b = jax.random.normal(k_b, (c_out,), jnp.float32) * 0.1
    gamma = 1.0 + 0.1 * jax.random.normal(k_g, (c_out,), jnp.float32)
    beta = 0.1 * jax.random.normal(k_be, (c_out,), jnp.float32)
    running_mean = 0.1 * jax.random.normal(k_m, (c_out,), jnp.float32)
    running_var = 0.5 + jnp.abs(jax.random.normal(k_v, (c_out,), jnp.float32))
    scale = gamma / jnp.sqrt(running_var + eps)
    shift = (conv_b - running_mean) * scale + beta
    return w, scale.reshape(1, c_out), shift.reshape(1, c_out)


def reference(agg_feat, layer1, layer2):
    """Pure-JAX reference mirroring the PyTorch forward (eval-mode BN) with the same mixed
    precision as the kernel (bf16 matmul inputs, folded-scale bf16 weights, f32 accum)."""
    M, K, C0 = agg_feat.shape
    h = agg_feat.reshape(M * K, C0)
    for w, s, b in (layer1, layer2):
        wf = (w.astype(jnp.float32) * s.astype(jnp.float32)).astype(jnp.bfloat16)
        h = jnp.dot(h.astype(jnp.bfloat16), wf, preferred_element_type=jnp.float32)
        h = jnp.maximum(h + b.astype(jnp.float32), 0.0)
    return jnp.max(h.reshape(M, K, -1), axis=1)


if __name__ == "__main__":
    # sizes = [4, 32, 64], batch_size = 2, N = 16 points per batch, K = 8 neighbors
    sizes = [4, 32, 64]
    batch_size = 2
    n_points = 16
    K = 8
    M = batch_size * n_points  # total nodes = rows of the mailbox

    key = jax.random.PRNGKey(0)
    k_x, k_l1, k_l2 = jax.random.split(key, 3)

    agg_feat = jax.random.normal(k_x, (M, K, sizes[0]), jnp.float32)
    layer1 = make_layer_params(k_l1, sizes[0], sizes[1])
    layer2 = make_layer_params(k_l2, sizes[1], sizes[2])

    out = pointnet_conv(agg_feat, layer1, layer2)   # tp auto-picked: 16 -> grid of 2
    out = jax.block_until_ready(out)

    ref = reference(agg_feat, layer1, layer2)
    assert out.shape == (M, sizes[-1])
    assert jnp.allclose(out, ref, atol=1e-3, rtol=1e-3)

    print("KERNEL_OK")
</pallas_src>

<mosaic_0001>
module attributes {stable_mosaic.version = 11 : i64} {
  func.func @pointnet_conv_kernel(%arg0: i32, %arg1: memref<16x32xf32, #tpu.memory_space<vmem>>, %arg2: memref<32x256xbf16, #tpu.memory_space<vmem>>, %arg3: memref<1x256xf32, #tpu.memory_space<vmem>>, %arg4: memref<32x64xbf16, #tpu.memory_space<vmem>>, %arg5: memref<1x64xf32, #tpu.memory_space<vmem>>, %arg6: memref<16x64xf32, #tpu.memory_space<vmem>>) attributes {dimension_semantics = [#tpu.dimension_semantics<parallel>], iteration_bounds = array<i64: 2>, scalar_prefetch = 0 : i64, scratch_operands = 0 : i64, tpu.core_type = #tpu.core_type<tc>, window_params = [{transform_indices = @transform_0, window_bounds = array<i64: 16, 32>}, {pipeline_mode = #tpu.pipeline_mode<synchronous>, transform_indices = @transform_1, window_bounds = array<i64: 32, 256>}, {pipeline_mode = #tpu.pipeline_mode<synchronous>, transform_indices = @transform_2, window_bounds = array<i64: 1, 256>}, {pipeline_mode = #tpu.pipeline_mode<synchronous>, transform_indices = @transform_3, window_bounds = array<i64: 32, 64>}, {pipeline_mode = #tpu.pipeline_mode<synchronous>, transform_indices = @transform_4, window_bounds = array<i64: 1, 64>}, {transform_indices = @transform_5, window_bounds = array<i64: 16, 64>}]} {
    %c0 = arith.constant 0 : index
    %c0_0 = arith.constant 0 : index
    %0 = vector.load %arg1[%c0, %c0_0] : memref<16x32xf32, #tpu.memory_space<vmem>>, vector<16x32xf32>
    %1 = arith.truncf %0 : vector<16x32xf32> to vector<16x32xbf16>
    %c0_1 = arith.constant 0 : index
    %c0_2 = arith.constant 0 : index
    %2 = vector.load %arg2[%c0_1, %c0_2] : memref<32x256xbf16, #tpu.memory_space<vmem>>, vector<32x256xbf16>
    %cst = arith.constant dense<0.000000e+00> : vector<16x256xf32>
    %3 = tpu.matmul %1, %2, %cst {dimension_numbers = #tpu.dot_dimension_numbers<[1], [0], [0], [1], [0, 0, 1, 1], [], []>} : vector<16x32xbf16>, vector<32x256xbf16>, vector<16x256xf32> -> vector<16x256xf32>
    %c0_3 = arith.constant 0 : index
    %c0_4 = arith.constant 0 : index
    %4 = vector.load %arg3[%c0_3, %c0_4] : memref<1x256xf32, #tpu.memory_space<vmem>>, vector<1x256xf32>
    %5 = vector.broadcast %4 : vector<1x256xf32> to vector<16x256xf32>
    %6 = arith.addf %3, %5 : vector<16x256xf32>
    %cst_5 = arith.constant 0.000000e+00 : f32
    %7 = vector.broadcast %cst_5 : f32 to vector<16x256xf32>
    %8 = arith.maximumf %6, %7 : vector<16x256xf32>
    %9 = arith.truncf %8 : vector<16x256xf32> to vector<16x256xbf16>
    %10 = vector.extract_strided_slice %9 {offsets = [0, 0], sizes = [16, 32], strides = [1, 1]} : vector<16x256xbf16> to vector<16x32xbf16>
    %c0_6 = arith.constant 0 : index
    %c0_7 = arith.constant 0 : index
    %11 = vector.load %arg4[%c0_6, %c0_7] : memref<32x64xbf16, #tpu.memory_space<vmem>>, vector<32x64xbf16>
    %cst_8 = arith.constant dense<0.000000e+00> : vector<16x64xf32>
    %12 = tpu.matmul %10, %11, %cst_8 {dimension_numbers = #tpu.dot_dimension_numbers<[1], [0], [0], [1], [0, 0, 1, 1], [], []>} : vector<16x32xbf16>, vector<32x64xbf16>, vector<16x64xf32> -> vector<16x64xf32>
    %c0_9 = arith.constant 0 : index
    %c0_10 = arith.constant 0 : index
    %13 = vector.load %arg5[%c0_9, %c0_10] : memref<1x64xf32, #tpu.memory_space<vmem>>, vector<1x64xf32>
    %14 = vector.broadcast %13 : vector<1x64xf32> to vector<16x64xf32>
    %15 = arith.addf %12, %14 : vector<16x64xf32>
    %cst_11 = arith.constant 0.000000e+00 : f32
    %16 = vector.broadcast %cst_11 : f32 to vector<16x64xf32>
    %17 = arith.maximumf %15, %16 : vector<16x64xf32>
    %18 = vector.extract_strided_slice %9 {offsets = [0, 32], sizes = [16, 32], strides = [1, 1]} : vector<16x256xbf16> to vector<16x32xbf16>
    %c0_12 = arith.constant 0 : index
    %c0_13 = arith.constant 0 : index
    %19 = vector.load %arg4[%c0_12, %c0_13] : memref<32x64xbf16, #tpu.memory_space<vmem>>, vector<32x64xbf16>
    %cst_14 = arith.constant dense<0.000000e+00> : vector<16x64xf32>
    %20 = tpu.matmul %18, %19, %cst_14 {dimension_numbers = #tpu.dot_dimension_numbers<[1], [0], [0], [1], [0, 0, 1, 1], [], []>} : vector<16x32xbf16>, vector<32x64xbf16>, vector<16x64xf32> -> vector<16x64xf32>
    %c0_15 = arith.constant 0 : index
    %c0_16 = arith.constant 0 : index
    %21 = vector.load %arg5[%c0_15, %c0_16] : memref<1x64xf32, #tpu.memory_space<vmem>>, vector<1x64xf32>
    %22 = vector.broadcast %21 : vector<1x64xf32> to vector<16x64xf32>
    %23 = arith.addf %20, %22 : vector<16x64xf32>
    %cst_17 = arith.constant 0.000000e+00 : f32
    %24 = vector.broadcast %cst_17 : f32 to vector<16x64xf32>
    %25 = arith.maximumf %23, %24 : vector<16x64xf32>
    %26 = arith.maximumf %17, %25 : vector<16x64xf32>
    %27 = vector.extract_strided_slice %9 {offsets = [0, 64], sizes = [16, 32], strides = [1, 1]} : vector<16x256xbf16> to vector<16x32xbf16>
    %c0_18 = arith.constant 0 : index
    %c0_19 = arith.constant 0 : index
    %28 = vector.load %arg4[%c0_18, %c0_19] : memref<32x64xbf16, #tpu.memory_space<vmem>>, vector<32x64xbf16>
    %cst_20 = arith.constant dense<0.000000e+00> : vector<16x64xf32>
    %29 = tpu.matmul %27, %28, %cst_20 {dimension_numbers = #tpu.dot_dimension_numbers<[1], [0], [0], [1], [0, 0, 1, 1], [], []>} : vector<16x32xbf16>, vector<32x64xbf16>, vector<16x64xf32> -> vector<16x64xf32>
    %c0_21 = arith.constant 0 : index
    %c0_22 = arith.constant 0 : index
    %30 = vector.load %arg5[%c0_21, %c0_22] : memref<1x64xf32, #tpu.memory_space<vmem>>, vector<1x64xf32>
    %31 = vector.broadcast %30 : vector<1x64xf32> to vector<16x64xf32>
    %32 = arith.addf %29, %31 : vector<16x64xf32>
    %cst_23 = arith.constant 0.000000e+00 : f32
    %33 = vector.broadcast %cst_23 : f32 to vector<16x64xf32>
    %34 = arith.maximumf %32, %33 : vector<16x64xf32>
    %35 = arith.maximumf %26, %34 : vector<16x64xf32>
    %36 = vector.extract_strided_slice %9 {offsets = [0, 96], sizes = [16, 32], strides = [1, 1]} : vector<16x256xbf16> to vector<16x32xbf16>
    %c0_24 = arith.constant 0 : index
    %c0_25 = arith.constant 0 : index
    %37 = vector.load %arg4[%c0_24, %c0_25] : memref<32x64xbf16, #tpu.memory_space<vmem>>, vector<32x64xbf16>
    %cst_26 = arith.constant dense<0.000000e+00> : vector<16x64xf32>
    %38 = tpu.matmul %36, %37, %cst_26 {dimension_numbers = #tpu.dot_dimension_numbers<[1], [0], [0], [1], [0, 0, 1, 1], [], []>} : vector<16x32xbf16>, vector<32x64xbf16>, vector<16x64xf32> -> vector<16x64xf32>
    %c0_27 = arith.constant 0 : index
    %c0_28 = arith.constant 0 : index
    %39 = vector.load %arg5[%c0_27, %c0_28] : memref<1x64xf32, #tpu.memory_space<vmem>>, vector<1x64xf32>
    %40 = vector.broadcast %39 : vector<1x64xf32> to vector<16x64xf32>
    %41 = arith.addf %38, %40 : vector<16x64xf32>
    %cst_29 = arith.constant 0.000000e+00 : f32
    %42 = vector.broadcast %cst_29 : f32 to vector<16x64xf32>
    %43 = arith.maximumf %41, %42 : vector<16x64xf32>
    %44 = arith.maximumf %35, %43 : vector<16x64xf32>
    %45 = vector.extract_strided_slice %9 {offsets = [0, 128], sizes = [16, 32], strides = [1, 1]} : vector<16x256xbf16> to vector<16x32xbf16>
    %c0_30 = arith.constant 0 : index
    %c0_31 = arith.constant 0 : index
    %46 = vector.load %arg4[%c0_30, %c0_31] : memref<32x64xbf16, #tpu.memory_space<vmem>>, vector<32x64xbf16>
    %cst_32 = arith.constant dense<0.000000e+00> : vector<16x64xf32>
    %47 = tpu.matmul %45, %46, %cst_32 {dimension_numbers = #tpu.dot_dimension_numbers<[1], [0], [0], [1], [0, 0, 1, 1], [], []>} : vector<16x32xbf16>, vector<32x64xbf16>, vector<16x64xf32> -> vector<16x64xf32>
    %c0_33 = arith.constant 0 : index
    %c0_34 = arith.constant 0 : index
    %48 = vector.load %arg5[%c0_33, %c0_34] : memref<1x64xf32, #tpu.memory_space<vmem>>, vector<1x64xf32>
    %49 = vector.broadcast %48 : vector<1x64xf32> to vector<16x64xf32>
    %50 = arith.addf %47, %49 : vector<16x64xf32>
    %cst_35 = arith.constant 0.000000e+00 : f32
    %51 = vector.broadcast %cst_35 : f32 to vector<16x64xf32>
    %52 = arith.maximumf %50, %51 : vector<16x64xf32>
    %53 = arith.maximumf %44, %52 : vector<16x64xf32>
    %54 = vector.extract_strided_slice %9 {offsets = [0, 160], sizes = [16, 32], strides = [1, 1]} : vector<16x256xbf16> to vector<16x32xbf16>
    %c0_36 = arith.constant 0 : index
    %c0_37 = arith.constant 0 : index
    %55 = vector.load %arg4[%c0_36, %c0_37] : memref<32x64xbf16, #tpu.memory_space<vmem>>, vector<32x64xbf16>
    %cst_38 = arith.constant dense<0.000000e+00> : vector<16x64xf32>
    %56 = tpu.matmul %54, %55, %cst_38 {dimension_numbers = #tpu.dot_dimension_numbers<[1], [0], [0], [1], [0, 0, 1, 1], [], []>} : vector<16x32xbf16>, vector<32x64xbf16>, vector<16x64xf32> -> vector<16x64xf32>
    %c0_39 = arith.constant 0 : index
    %c0_40 = arith.constant 0 : index
    %57 = vector.load %arg5[%c0_39, %c0_40] : memref<1x64xf32, #tpu.memory_space<vmem>>, vector<1x64xf32>
    %58 = vector.broadcast %57 : vector<1x64xf32> to vector<16x64xf32>
    %59 = arith.addf %56, %58 : vector<16x64xf32>
    %cst_41 = arith.constant 0.000000e+00 : f32
    %60 = vector.broadcast %cst_41 : f32 to vector<16x64xf32>
    %61 = arith.maximumf %59, %60 : vector<16x64xf32>
    %62 = arith.maximumf %53, %61 : vector<16x64xf32>
    %63 = vector.extract_strided_slice %9 {offsets = [0, 192], sizes = [16, 32], strides = [1, 1]} : vector<16x256xbf16> to vector<16x32xbf16>
    %c0_42 = arith.constant 0 : index
    %c0_43 = arith.constant 0 : index
    %64 = vector.load %arg4[%c0_42, %c0_43] : memref<32x64xbf16, #tpu.memory_space<vmem>>, vector<32x64xbf16>
    %cst_44 = arith.constant dense<0.000000e+00> : vector<16x64xf32>
    %65 = tpu.matmul %63, %64, %cst_44 {dimension_numbers = #tpu.dot_dimension_numbers<[1], [0], [0], [1], [0, 0, 1, 1], [], []>} : vector<16x32xbf16>, vector<32x64xbf16>, vector<16x64xf32> -> vector<16x64xf32>
    %c0_45 = arith.constant 0 : index
    %c0_46 = arith.constant 0 : index
    %66 = vector.load %arg5[%c0_45, %c0_46] : memref<1x64xf32, #tpu.memory_space<vmem>>, vector<1x64xf32>
    %67 = vector.broadcast %66 : vector<1x64xf32> to vector<16x64xf32>
    %68 = arith.addf %65, %67 : vector<16x64xf32>
    %cst_47 = arith.constant 0.000000e+00 : f32
    %69 = vector.broadcast %cst_47 : f32 to vector<16x64xf32>
    %70 = arith.maximumf %68, %69 : vector<16x64xf32>
    %71 = arith.maximumf %62, %70 : vector<16x64xf32>
    %72 = vector.extract_strided_slice %9 {offsets = [0, 224], sizes = [16, 32], strides = [1, 1]} : vector<16x256xbf16> to vector<16x32xbf16>
    %c0_48 = arith.constant 0 : index
    %c0_49 = arith.constant 0 : index
    %73 = vector.load %arg4[%c0_48, %c0_49] : memref<32x64xbf16, #tpu.memory_space<vmem>>, vector<32x64xbf16>
    %cst_50 = arith.constant dense<0.000000e+00> : vector<16x64xf32>
    %74 = tpu.matmul %72, %73, %cst_50 {dimension_numbers = #tpu.dot_dimension_numbers<[1], [0], [0], [1], [0, 0, 1, 1], [], []>} : vector<16x32xbf16>, vector<32x64xbf16>, vector<16x64xf32> -> vector<16x64xf32>
    %c0_51 = arith.constant 0 : index
    %c0_52 = arith.constant 0 : index
    %75 = vector.load %arg5[%c0_51, %c0_52] : memref<1x64xf32, #tpu.memory_space<vmem>>, vector<1x64xf32>
    %76 = vector.broadcast %75 : vector<1x64xf32> to vector<16x64xf32>
    %77 = arith.addf %74, %76 : vector<16x64xf32>
    %cst_53 = arith.constant 0.000000e+00 : f32
    %78 = vector.broadcast %cst_53 : f32 to vector<16x64xf32>
    %79 = arith.maximumf %77, %78 : vector<16x64xf32>
    %80 = arith.maximumf %71, %79 : vector<16x64xf32>
    %c0_54 = arith.constant 0 : index
    %c0_55 = arith.constant 0 : index
    %81 = vector.load %arg6[%c0_54, %c0_55] : memref<16x64xf32, #tpu.memory_space<vmem>>, vector<16x64xf32>
    tpu.vector_store %arg6[%c0_54, %c0_55], %80 {strides = array<i32>} : memref<16x64xf32, #tpu.memory_space<vmem>>, vector<16x64xf32>,
    return
  }
  func.func @transform_0(%arg0: i32) -> (i32, i32) {
    %c0_i32 = arith.constant 0 : i32
    %c0_i32_0 = arith.constant 0 : i32
    return %arg0, %c0_i32 : i32, i32
  }
  func.func @transform_1(%arg0: i32) -> (i32, i32) {
    %c0_i32 = arith.constant 0 : i32
    %c0_i32_0 = arith.constant 0 : i32
    %c0_i32_1 = arith.constant 0 : i32
    return %c0_i32, %c0_i32_0 : i32, i32
  }
  func.func @transform_2(%arg0: i32) -> (i32, i32) {
    %c0_i32 = arith.constant 0 : i32
    %c0_i32_0 = arith.constant 0 : i32
    %c0_i32_1 = arith.constant 0 : i32
    return %c0_i32, %c0_i32_0 : i32, i32
  }
  func.func @transform_3(%arg0: i32) -> (i32, i32) {
    %c0_i32 = arith.constant 0 : i32
    %c0_i32_0 = arith.constant 0 : i32
    %c0_i32_1 = arith.constant 0 : i32
    return %c0_i32, %c0_i32_0 : i32, i32
  }
  func.func @transform_4(%arg0: i32) -> (i32, i32) {
    %c0_i32 = arith.constant 0 : i32
    %c0_i32_0 = arith.constant 0 : i32
    %c0_i32_1 = arith.constant 0 : i32
    return %c0_i32, %c0_i32_0 : i32, i32
  }
  func.func @transform_5(%arg0: i32) -> (i32, i32) {
    %c0_i32 = arith.constant 0 : i32
    %c0_i32_0 = arith.constant 0 : i32
    return %arg0, %c0_i32 : i32, i32
  }
}

</mosaic_0001>

<llo_original>
// kernel: tpu_custom_call.1
$region0: #{tpu_custom_call.1}
  #allocation0 [shape = 'u32[]', space=smem, size = 0x4, offset = 0x4, fixed_abs, tag = 'smem constant byte address 0x4 - core index']
  #allocation1 [shape = 'u32[144,128]{1,0:T(1,128)}', space=vmem, size = 0x12000, scoped, tag = 'internal scratch']
  %s0 = inlined_call_operand.hbm [shape: f32[32,32], index: 0, kind: input, shape index: {}]
  %s1 = inlined_call_operand.hbm [shape: bf16[32,256], index: 1, kind: input, shape index: {}]
  %s2 = inlined_call_operand.vmem [shape: f32[1,256], index: 2, kind: input, shape index: {}]
  %s3 = inlined_call_operand.hbm [shape: bf16[32,64], index: 3, kind: input, shape index: {}]
  %s4 = inlined_call_operand.vmem [shape: f32[1,64], index: 4, kind: input, shape index: {}]
  %s5 = inlined_call_operand.hbm [shape: f32[32,64], index: 5, kind: output, shape index: {}]
  %s6 = sld [smem:[#allocation0]]
  $region65: #{tpu_custom_call.1} parent=0
    _
  %s8 = ssub.s32 1, %s6
  %s9 = scalar_select 0, %s8, %s6
  $region1: #{tpu_custom_call.1} parent=0
    #allocation2 [shape = 'u8[16384]{0}', space=vmem, size = 0x4000, scoped, tag = 'input window, operand 0']
    #allocation3 [shape = 's32[2]{0}', space=sflag, size = 0x8, scoped, tag = 'scoped memory for tpu_custom_call.1']
    #allocation4 [shape = 's32[2]{0}', space=sflag, size = 0x8, scoped, tag = 'scoped memory for tpu_custom_call.1']
    #allocation5 [shape = 'u8[16384]{0}', space=vmem, size = 0x4000, scoped, tag = 'input window, operand 1, single buffered']
    #allocation6 [shape = 's32[1]{0}', space=sflag, size = 0x4, scoped, tag = 'scoped memory for tpu_custom_call.1']
    #allocation7 [shape = 'u8[8192]{0}', space=vmem, size = 0x2000, scoped, tag = 'input window, operand 3, single buffered']
    #allocation8 [shape = 'u8[16384]{0}', space=vmem, size = 0x4000, scoped, tag = 'output window, operand 0']
    %10 = vsyncpa [#allocation3], 0
    %s11 = scalar_lea.sflag [#allocation3], 1
    %12 = vsyncpa %s11, 0
    %13 = vsyncpa [#allocation6], 0
    %14 = vsyncpa [#allocation4], 0
    %s15 = scalar_lea.sflag [#allocation4], 1
    %16 = vsyncpa %s15, 0
    loop: start=0, step=1, limit=4
    $region2: #{tpu_custom_call.1} parent=1 // loop_pre_header
      _
    $region3: #{tpu_custom_call.1} parent=1 // loop_header
      %s18 = sphi 0, %s22
      %p19 = scmp.ge.s32.totalorder %s18, 4
      %s28 = sphi 0, %s30
      %s31 = sphi 0, %s28
      %s32 = sphi 0, %s31
      %s48 = sphi 0, %s32
      %s52 = sphi 0, %s52
      %s54 = sphi 0, %s52
      %s55 = sphi 0, %s54
      %s69 = sphi 0, %s55
      %s73 = sphi 0, %s73
      %s75 = sphi 0, %s73
      %s76 = sphi 0, %s75
      %s90 = sphi 0, %s76
      %s94 = sphi 0, %s94
      %s96 = sphi 0, %s94
      %s97 = sphi 0, %s96
      %s111 = sphi 0, %s97
      %s115 = sphi 0, %s115
      %s117 = sphi 0, %s115
      %s118 = sphi 0, %s117
      %s132 = sphi 0, %s118
      %s138 = sphi 0, %s140
      %s141 = sphi 0, %s138
      %s142 = sphi 0, %s141
      %s158 = sphi 0, %s142
    $region4: #{tpu_custom_call.1} parent=1 // loop_header_branch
      %21 = sbr.rel (%p19) target = $region8
    $region5: #{tpu_custom_call.1} parent=1 // loop_body
      %s23 = ssub.s32 %s18, 1
      %s24 = ssub.s32 %s18, 2
      %s25 = sadd.s32 %s18, 1
      %s26 = ssub.s32 %s18, %s25
      %p27 = scmp.eq.s32.totalorder %s26, 0
      %s29 = sadd.s32 %s28, 1
      %s30 = scalar_select %p27, %s28, %s29
      %p33 = pneg %p27
      %p34 = scmp.eq.s32.totalorder %s18, 1
      %p35 = por %p33, %p34
      %p36 = scmp.ne.s32.totalorder %s28, %s31
      %p37 = scmp.eq.s32.totalorder %s18, 0
      %p38 = por %p36, %p37
      %p39 = scmp.ne.s32.totalorder %s28, %s31
      %p40 = scmp.eq.s32.totalorder %s23, 1
      %p41 = por %p39, %p40
      %p42 = scmp.ne.s32.totalorder %s31, %s32
      %p43 = scmp.eq.s32.totalorder %s23, 0
      %p44 = por %p42, %p43
      %p45 = scmp.ne.s32.totalorder %s31, %s32
      %p46 = scmp.eq.s32.totalorder %s24, 1
      %p47 = por %p45, %p46
      %p49 = scmp.ne.s32.totalorder %s32, %s48
      %p50 = scmp.eq.s32.totalorder %s24, 0
      %p51 = por %p49, %p50
      %s53 = sadd.s32 %s52, 1
      %p56 = scmp.eq.s32.totalorder %s18, 1
      %p57 = scmp.ne.s32.totalorder %s52, %s54
      %p58 = scmp.eq.s32.totalorder %s18, 0
      %p59 = por %p57, %p58
      %p60 = scmp.ne.s32.totalorder %s52, %s54
      %p61 = scmp.eq.s32.totalorder %s23, 1
      %p62 = por %p60, %p61
      %p63 = scmp.ne.s32.totalorder %s54, %s55
      %p64 = scmp.eq.s32.totalorder %s23, 0
      %p65 = por %p63, %p64
      %p66 = scmp.ne.s32.totalorder %s54, %s55
      %p67 = scmp.eq.s32.totalorder %s24, 1
      %p68 = por %p66, %p67
      %p70 = scmp.ne.s32.totalorder %s55, %s69
      %p71 = scmp.eq.s32.totalorder %s24, 0
      %p72 = por %p70, %p71
      %s74 = sadd.s32 %s73, 1
      %p77 = scmp.eq.s32.totalorder %s18, 1
      %p78 = scmp.ne.s32.totalorder %s73, %s75
      %p79 = scmp.eq.s32.totalorder %s18, 0
      %p80 = por %p78, %p79
      %p81 = scmp.ne.s32.totalorder %s73, %s75
      %p82 = scmp.eq.s32.totalorder %s23, 1
      %p83 = por %p81, %p82
      %p84 = scmp.ne.s32.totalorder %s75, %s76
      %p85 = scmp.eq.s32.totalorder %s23, 0
      %p86 = por %p84, %p85
      %p87 = scmp.ne.s32.totalorder %s75, %s76
      %p88 = scmp.eq.s32.totalorder %s24, 1
      %p89 = por %p87, %p88
      %p91 = scmp.ne.s32.totalorder %s76, %s90
      %p92 = scmp.eq.s32.totalorder %s24, 0
      %p93 = por %p91, %p92
      %s95 = sadd.s32 %s94, 1
      %p98 = scmp.eq.s32.totalorder %s18, 1
      %p99 = scmp.ne.s32.totalorder %s94, %s96
      %p100 = scmp.eq.s32.totalorder %s18, 0
      %p101 = por %p99, %p100
      %p102 = scmp.ne.s32.totalorder %s94, %s96
      %p103 = scmp.eq.s32.totalorder %s23, 1
      %p104 = por %p102, %p103
      %p105 = scmp.ne.s32.totalorder %s96, %s97
      %p106 = scmp.eq.s32.totalorder %s23, 0
      %p107 = por %p105, %p106
      %p108 = scmp.ne.s32.totalorder %s96, %s97
      %p109 = scmp.eq.s32.totalorder %s24, 1
      %p110 = por %p108, %p109
      %p112 = scmp.ne.s32.totalorder %s97, %s111
      %p113 = scmp.eq.s32.totalorder %s24, 0
      %p114 = por %p112, %p113
      %s116 = sadd.s32 %s115, 1
      %p119 = scmp.eq.s32.totalorder %s18, 1
      %p120 = scmp.ne.s32.totalorder %s115, %s117
      %p121 = scmp.eq.s32.totalorder %s18, 0
      %p122 = por %p120, %p121
      %p123 = scmp.ne.s32.totalorder %s115, %s117
      %p124 = scmp.eq.s32.totalorder %s23, 1
      %p125 = por %p123, %p124
      %p126 = scmp.ne.s32.totalorder %s117, %s118
      %p127 = scmp.eq.s32.totalorder %s23, 0
      %p128 = por %p126, %p127
      %p129 = scmp.ne.s32.totalorder %s117, %s118
      %p130 = scmp.eq.s32.totalorder %s24, 1
      %p131 = por %p129, %p130
      %p133 = scmp.ne.s32.totalorder %s118, %s132
      %p134 = scmp.eq.s32.totalorder %s24, 0
      %p135 = por %p133, %p134
      %s136 = ssub.s32 %s18, %s25
      %p137 = scmp.eq.s32.totalorder %s136, 0
      %s139 = sadd.s32 %s138, 1
      %s140 = scalar_select %p137, %s138, %s139
      %p143 = pneg %p137
      %p144 = scmp.eq.s32.totalorder %s18, 1
      %p145 = por %p143, %p144
      %p146 = scmp.ne.s32.totalorder %s138, %s141
      %p147 = scmp.eq.s32.totalorder %s18, 0
      %p148 = por %p146, %p147
      %p149 = scmp.ne.s32.totalorder %s138, %s141
      %p150 = scmp.eq.s32.totalorder %s23, 1
      %p151 = por %p149, %p150
      %p152 = scmp.ne.s32.totalorder %s141, %s142
      %p153 = scmp.eq.s32.totalorder %s23, 0
      %p154 = por %p152, %p153
      %p155 = scmp.ne.s32.totalorder %s141, %s142
      %p156 = scmp.eq.s32.totalorder %s24, 1
      %p157 = por %p155, %p156
      %p159 = scmp.ne.s32.totalorder %s142, %s158
      %p160 = scmp.eq.s32.totalorder %s24, 0
      %p161 = por %p159, %p160
      %p162 = scmp.le.s32.totalorder 1, %s18
      %p163 = scmp.lt.s32.totalorder %s18, 3
      %p164 = pnand %p162, %p163
      %p165 = pneg %p164
      // Predicated region
      $region9: #{tpu_custom_call.1} parent=5 // pred_check
        _
      $region10: #{tpu_custom_call.1} parent=5 // pred_check_branch
        %167 = sbr.rel (%p164) target = $region12
      $region11: #{tpu_custom_call.1} parent=5 // pred_region
        %s168 = ssub.s32 %s18, 1
        // Predicated region
        $region13: #{tpu_custom_call.1} parent=11 // pred_check
          %p169 = pneg %p65
        $region14: #{tpu_custom_call.1} parent=11 // pred_check_branch
          %171 = sbr.rel (%p169) target = $region16
        $region15: #{tpu_custom_call.1} parent=11 // pred_region
          %s173 = ssub.s32 512, 512
          %174 = vsyncadd [#allocation6], %s173
          %s175 = sshll.u32 [#allocation5], 4
          %s176 = int_to_ptr.vmem [resolvable:$true] %s175
          %181 = dma.hbm_to_vmem [thread:$0]  %s1, 512, %s176, [#allocation6], 128, 128, 8
        $region16: #{tpu_custom_call.1} parent=11 // pred_fallthru
          _
        // Predicated region
        $region17: #{tpu_custom_call.1} parent=11 // pred_check
          %p182 = pneg %p86
        $region18: #{tpu_custom_call.1} parent=11 // pred_check_branch
          %184 = sbr.rel (%p182) target = $region20
        $region19: #{tpu_custom_call.1} parent=11 // pred_region
          _
        $region20: #{tpu_custom_call.1} parent=11 // pred_fallthru
          _
        // Predicated region
        $region21: #{tpu_custom_call.1} parent=11 // pred_check
          %p185 = pneg %p107
        $region22: #{tpu_custom_call.1} parent=11 // pred_check_branch
          %187 = sbr.rel (%p185) target = $region24
        $region23: #{tpu_custom_call.1} parent=11 // pred_region
          %s189 = ssub.s32 256, 256
          %190 = vsyncadd [#allocation6], %s189
          %s191 = sshll.u32 [#allocation7], 4
          %s192 = int_to_ptr.vmem [resolvable:$true] %s191
          %197 = dma.hbm_to_vmem [thread:$0]  %s3, 256, %s192, [#allocation6], 64, 64, 4
        $region24: #{tpu_custom_call.1} parent=11 // pred_fallthru
          _
        // Predicated region
        $region25: #{tpu_custom_call.1} parent=11 // pred_check
          %p198 = pneg %p128
        $region26: #{tpu_custom_call.1} parent=11 // pred_check_branch
          %200 = sbr.rel (%p198) target = $region28
        $region27: #{tpu_custom_call.1} parent=11 // pred_region
          _
        $region28: #{tpu_custom_call.1} parent=11 // pred_fallthru
          _
      $region12: #{tpu_custom_call.1} parent=5 // pred_fallthru
        _
      %p201 = scmp.lt.s32.totalorder %s18, 2
      // Predicated region
      $region29: #{tpu_custom_call.1} parent=5 // pred_check
        %p202 = pneg %p201
      $region30: #{tpu_custom_call.1} parent=5 // pred_check_branch
        %204 = sbr.rel (%p202) target = $region32
      $region31: #{tpu_custom_call.1} parent=5 // pred_region
        // Predicated region
        $region33: #{tpu_custom_call.1} parent=31 // pred_check
          %p205 = pneg %p38
        $region34: #{tpu_custom_call.1} parent=31 // pred_check_branch
          %207 = sbr.rel (%p205) target = $region36
        $region35: #{tpu_custom_call.1} parent=31 // pred_region
          %s208 = sand.u32 %s28, 1
          %s209 = scalar_lea.sflag [#allocation3], %s208
          %s210 = sand.u32 %s28, 1
          %s211 = smul.addr %s210, 16
          %s212 = scalar_lea.vmem [#allocation2], %s211
          %s213 = smul.u32 2, %s18
          %s215 = ssub.s32 256, 256
          %216 = vsyncadd %s209, %s215
          %s217 = smul.addr %s213, 128
          %s218 = scalar_lea.hbm %s0, %s217
          %s219 = sshll.u32 %s212, 4
          %s220 = int_to_ptr.vmem [resolvable:$true] %s219
          %225 = dma.hbm_to_vmem [thread:$0]  %s218, 256, %s220, %s209, 128, 128, 8
        $region36: #{tpu_custom_call.1} parent=31 // pred_fallthru
          _
      $region32: #{tpu_custom_call.1} parent=5 // pred_fallthru
        _
      %p226 = scmp.le.s32.totalorder 1, %s18
      %p227 = scmp.lt.s32.totalorder %s18, 3
      %p228 = pnand %p226, %p227
      %p229 = pneg %p228
      // Predicated region
      $region37: #{tpu_custom_call.1} parent=5 // pred_check
        _
      $region38: #{tpu_custom_call.1} parent=5 // pred_check_branch
        %231 = sbr.rel (%p228) target = $region40
      $region39: #{tpu_custom_call.1} parent=5 // pred_region
        %s232 = ssub.s32 %s18, 1
        %s233 = sand.u32 %s31, 1
        %s234 = scalar_lea.sflag [#allocation3], %s233
        %s235 = sand.u32 %s31, 1
        %s236 = smul.addr %s235, 16
        %s237 = scalar_lea.vmem [#allocation2], %s236
        // Predicated region
        $region41: #{tpu_custom_call.1} parent=39 // pred_check
          %p238 = pneg %p44
        $region42: #{tpu_custom_call.1} parent=39 // pred_check_branch
          %240 = sbr.rel (%p238) target = $region44
        $region43: #{tpu_custom_call.1} parent=39 // pred_region
          %241 = dma.done %s234, 256
        $region44: #{tpu_custom_call.1} parent=39 // pred_fallthru
          _
        // Predicated region
        $region45: #{tpu_custom_call.1} parent=39 // pred_check
          %p242 = pneg %p65
        $region46: #{tpu_custom_call.1} parent=39 // pred_check_branch
          %244 = sbr.rel (%p242) target = $region48
        $region47: #{tpu_custom_call.1} parent=39 // pred_region
          %245 = dma.done [#allocation6], 512
        $region48: #{tpu_custom_call.1} parent=39 // pred_fallthru
          _
        // Predicated region
        $region49: #{tpu_custom_call.1} parent=39 // pred_check
          %p246 = pneg %p107
        $region50: #{tpu_custom_call.1} parent=39 // pred_check_branch
          %248 = sbr.rel (%p246) target = $region52
        $region51: #{tpu_custom_call.1} parent=39 // pred_region
          %249 = dma.done [#allocation6], 256
        $region52: #{tpu_custom_call.1} parent=39 // pred_fallthru
          _
        %s250 = sand.u32 %s31, 1
        %s251 = scalar_lea.sflag [#allocation3], %s250
        %s252 = sand.u32 %s31, 1
        %s253 = smul.addr %s252, 16
        %s254 = scalar_lea.vmem [#allocation2], %s253
        %p255 = pneg %p44
        %p256 = pneg %p41
        %p257 = pneg %p65
        %p258 = pneg %p62
        %p259 = pneg %p86
        %p260 = pneg %p83
        %p261 = pneg %p107
        %p262 = pneg %p104
        %p263 = pneg %p128
        %p264 = pneg %p125
        %p265 = pneg %p154
        %p266 = pneg %p151
        %s267 = sand.u32 %s141, 1
        %s268 = scalar_lea.sflag [#allocation4], %s267
        %s269 = sand.u32 %s141, 1
        %s270 = smul.addr %s269, 16
        %s271 = scalar_lea.vmem [#allocation8], %s270
        %s272 = smul.u32 2, %s23
        %s273 = smul.u32 2, %s23
        %v275 = vld [vmem:[%s237] sm:$0xff]
        %v276 = vld [vmem:[%s237 + $0x8] sm:$0xff]
        %v277 = vpack.c.bf16 %v276, %v275
        %v278 = vld [vmem:[#allocation5] sm:$0xff]
        %v279 = vld [vmem:[#allocation5 + $0x8] sm:$0xff]
        %v280 = vld [vmem:[#allocation5 + $0x10] sm:$0xff]
        %v281 = vld [vmem:[#allocation5 + $0x18] sm:$0xff]
        %v282 = vld [vmem:[%s2] sm:$0x3]
        %v284 = vlaneseq
        %v285 = vshrl.u32 %v284, 7
        %v286 = vsub.s32 0, %v285
        %v287 = vrot.slane %v282, %v286
        %v288 = vlaneseq
        %v289 = vshrl.u32 %v288, 7
        %v290 = vsub.s32 1, %v289
        %v291 = vrot.slane %v282, %v290
        %v298 = vunpack.c.l.b16 %v278
        %v299 = vunpack.c.h.b16 %v278
        %v300 = vunpack.c.l.b16 %v279
        %v301 = vunpack.c.h.b16 %v279
        %v302 = vunpack.c.l.b16 %v280
        %v303 = vunpack.c.h.b16 %v280
        %v304 = vunpack.c.l.b16 %v281
        %v305 = vunpack.c.h.b16 %v281
        %v306 = vpack.c.b16 %v300, %v298
        %v307 = vpack.c.b16 %v301, %v299
        %v308 = vpack.c.b16 %v304, %v302
        %v309 = vpack.c.b16 %v305, %v303
        %vm314 = vcmask 261120
        %v316 = vsel %vm314, %v277, 0
        %318 = vmatprep.subr.bf16.mxu0 %v307
        %319 = vmatpush1.bf16.msra.mxu0 %v306
        %320 = vmatprep.subr.bf16.mxu0 %v309
        %321 = vmatpush1.bf16.msra.mxu0 %v308
        %322 = vmatprep.subr.bf16.mxu0 0
        %323 = vmatpush1.bf16.msra.mxu0 0
        %324 = vmatprep.subr.bf16.mxu0 0
        %325 = vmatpush1.bf16.msra.mxu0 0
        %326 = vmatprep.subr.bf16.mxu0 0
        %327 = vmatpush1.bf16.msra.mxu0 0
        %328 = vmatprep.subr.bf16.mxu0 0
        %329 = vmatpush1.bf16.msra.mxu0 0
        %330 = vmatprep.subr.bf16.mxu0 0
        %331 = vmatpush1.bf16.msra.mxu0 0
        %332 = vmatprep.subr.bf16.mxu0 0
        %333 = vmatpush1.bf16.msra.mxu0 0
        %334 = vmatprep.subr.bf16.mxu0 0
        %335 = vmatpush1.bf16.msra.mxu0 0
        %336 = vmatprep.subr.bf16.mxu0 0
        %337 = vmatpush1.bf16.msra.mxu0 0
        %338 = vmatprep.subr.bf16.mxu0 0
        %339 = vmatpush1.bf16.msra.mxu0 0
        %340 = vmatprep.subr.bf16.mxu0 0
        %341 = vmatpush1.bf16.msra.mxu0 0
        %342 = vmatprep.subr.bf16.mxu0 0
        %343 = vmatpush1.bf16.msra.mxu0 0
        %344 = vmatprep.subr.bf16.mxu0 0
        %345 = vmatpush1.bf16.msra.mxu0 0
        %346 = vmatprep.subr.bf16.mxu0 0
        %347 = vmatpush1.bf16.msra.mxu0 0
        %348 = vmatprep.subr.bf16.mxu0 0
        %349 = vmatpush1.bf16.msra.mxu0 0
        %350 = vmatprep.mubr.bf16.mxu0 0
        %351 = vmatmul.mubr.bf16.gmra.mrb[0].mxu0 %v316
        %v352 = vpop.f32.mrb[0].mxu0
        %v353 = vadd.f32 %v287, %v352
        %v354 = vpop.f32.mrb[0].mxu0
        %v355 = vadd.f32 %v291, %v354
        %v356 = vpop.f32.mrb[0].mxu0
        %v357 = vadd.f32 %v287, %v356
        %v358 = vpop.f32.mrb[0].mxu0
        %v359 = vadd.f32 %v291, %v358
        %360 = vdwg.mxu0
        %v361 = vmax.f32 %v353, 0.0
        %v362 = vmax.f32 %v355, 0.0
        %v363 = vmax.f32 %v357, 0.0
        %v364 = vmax.f32 %v359, 0.0
        %v365 = vpack.c.bf16 %v363, %v361
        %v366 = vpack.c.bf16 %v364, %v362
        %v367 = vld [vmem:[#allocation7] sm:$0xf]
        %v368 = vld [vmem:[#allocation7 + $0x4] sm:$0xf]
        %v369 = vld [vmem:[#allocation7 + $0x8] sm:$0xf]
        %v370 = vld [vmem:[#allocation7 + $0xc] sm:$0xf]
        %v371 = vld [vmem:[%s4] sm:$0x1]
        %v373 = vlaneseq
        %v374 = vshrl.u32 %v373, 7
        %v375 = vsub.s32 0, %v374
        %v376 = vrot.slane %v371, %v375
        %v382 = vunpack.c.l.b16 %v367
        %v383 = vunpack.c.l.b16 %v368
        %v384 = vunpack.c.l.b16 %v369
        %v385 = vunpack.c.l.b16 %v370
        %v386 = vpack.c.b16 %v383, %v382
        %v387 = vpack.c.b16 %v385, %v384
        %v391 = vsel %vm314, %v365, 0
        %393 = vmatprep.subr.bf16.mxu0 0
        %394 = vmatpush1.bf16.msra.mxu0 %v386
        %395 = vmatprep.subr.bf16.mxu0 0
        %396 = vmatpush1.bf16.msra.mxu0 %v387
        %397 = vmatprep.subr.bf16.mxu0 0
        %398 = vmatpush1.bf16.msra.mxu0 0
        %399 = vmatprep.subr.bf16.mxu0 0
        %400 = vmatpush1.bf16.msra.mxu0 0
        %401 = vmatprep.subr.bf16.mxu0 0
        %402 = vmatpush1.bf16.msra.mxu0 0
        %403 = vmatprep.subr.bf16.mxu0 0
        %404 = vmatpush1.bf16.msra.mxu0 0
        %405 = vmatprep.subr.bf16.mxu0 0
        %406 = vmatpush1.bf16.msra.mxu0 0
        %407 = vmatprep.subr.bf16.mxu0 0
        %408 = vmatpush1.bf16.msra.mxu0 0
        %409 = vmatprep.subr.bf16.mxu0 0
        %410 = vmatpush1.bf16.msra.mxu0 0
        %411 = vmatprep.subr.bf16.mxu0 0
        %412 = vmatpush1.bf16.msra.mxu0 0
        %413 = vmatprep.subr.bf16.mxu0 0
        %414 = vmatpush1.bf16.msra.mxu0 0
        %415 = vmatprep.subr.bf16.mxu0 0
        %416 = vmatpush1.bf16.msra.mxu0 0
        %417 = vmatprep.subr.bf16.mxu0 0
        %418 = vmatpush1.bf16.msra.mxu0 0
        %419 = vmatprep.subr.bf16.mxu0 0
        %420 = vmatpush1.bf16.msra.mxu0 0
        %421 = vmatprep.subr.bf16.mxu0 0
        %422 = vmatpush1.bf16.msra.mxu0 0
        %423 = vmatprep.subr.bf16.mxu0 0
        %424 = vmatpush1.bf16.msra.mxu0 0
        %425 = vmatprep.mubr.bf16.mxu0 0
        %426 = vmatmul.mubr.bf16.gmra.mrb[0].mxu0 %v391
        %v427 = vpop.f32.mrb[0].mxu0
        %v428 = vadd.f32 %v376, %v427
        %v429 = vpop.f32.mrb[0].mxu0
        %v430 = vpop.f32.mrb[0].mxu0
        %v431 = vadd.f32 %v376, %v430
        %v432 = vpop.f32.mrb[0].mxu0
        %433 = vdwg.mxu0
        %v434 = vmax.f32 %v428, 0.0
        %v435 = vmax.f32 %v431, 0.0
        %437 = vrot.lane.b32.xlu0 %v365, 96
        %v438 = vpop.permute.xlu0 %437
        %v440 = vsel %vm314, %v438, 0
        %442 = vmatprep.subr.bf16.mxu0 0
        %443 = vmatpush1.bf16.msra.mxu0 %v386
        %444 = vmatprep.subr.bf16.mxu0 0
        %445 = vmatpush1.bf16.msra.mxu0 %v387
        %446 = vmatprep.subr.bf16.mxu0 0
        %447 = vmatpush1.bf16.msra.mxu0 0
        %448 = vmatprep.subr.bf16.mxu0 0
        %449 = vmatpush1.bf16.msra.mxu0 0
        %450 = vmatprep.subr.bf16.mxu0 0
        %451 = vmatpush1.bf16.msra.mxu0 0
        %452 = vmatprep.subr.bf16.mxu0 0
        %453 = vmatpush1.bf16.msra.mxu0 0
        %454 = vmatprep.subr.bf16.mxu0 0
        %455 = vmatpush1.bf16.msra.mxu0 0
        %456 = vmatprep.subr.bf16.mxu0 0
        %457 = vmatpush1.bf16.msra.mxu0 0
        %458 = vmatprep.subr.bf16.mxu0 0
        %459 = vmatpush1.bf16.msra.mxu0 0
        %460 = vmatprep.subr.bf16.mxu0 0
        %461 = vmatpush1.bf16.msra.mxu0 0
        %462 = vmatprep.subr.bf16.mxu0 0
        %463 = vmatpush1.bf16.msra.mxu0 0
        %464 = vmatprep.subr.bf16.mxu0 0
        %465 = vmatpush1.bf16.msra.mxu0 0
        %466 = vmatprep.subr.bf16.mxu0 0
        %467 = vmatpush1.bf16.msra.mxu0 0
        %468 = vmatprep.subr.bf16.mxu0 0
        %469 = vmatpush1.bf16.msra.mxu0 0
        %470 = vmatprep.subr.bf16.mxu0 0
        %471 = vmatpush1.bf16.msra.mxu0 0
        %472 = vmatprep.subr.bf16.mxu0 0
        %473 = vmatpush1.bf16.msra.mxu0 0
        %474 = vmatprep.mubr.bf16.mxu0 0
        %475 = vmatmul.mubr.bf16.gmra.mrb[0].mxu0 %v440
        %v476 = vpop.f32.mrb[0].mxu0
        %v477 = vadd.f32 %v376, %v476
        %v478 = vpop.f32.mrb[0].mxu0
        %v479 = vpop.f32.mrb[0].mxu0
        %v480 = vadd.f32 %v376, %v479
        %v481 = vpop.f32.mrb[0].mxu0
        %482 = vdwg.mxu0
        %v483 = vmax.f32 %v477, 0.0
        %v484 = vmax.f32 %v480, 0.0
        %v485 = vmax.f32 %v434, %v483
        %v486 = vmax.f32 %v435, %v484
        %487 = vrot.lane.b32.xlu0 %v365, 64
        %v488 = vpop.permute.xlu0 %487
        %v490 = vsel %vm314, %v488, 0
        %492 = vmatprep.subr.bf16.mxu0 0
        %493 = vmatpush1.bf16.msra.mxu0 %v386
        %494 = vmatprep.subr.bf16.mxu0 0
        %495 = vmatpush1.bf16.msra.mxu0 %v387
        %496 = vmatprep.subr.bf16.mxu0 0
        %497 = vmatpush1.bf16.msra.mxu0 0
        %498 = vmatprep.subr.bf16.mxu0 0
        %499 = vmatpush1.bf16.msra.mxu0 0
        %500 = vmatprep.subr.bf16.mxu0 0
        %501 = vmatpush1.bf16.msra.mxu0 0
        %502 = vmatprep.subr.bf16.mxu0 0
        %503 = vmatpush1.bf16.msra.mxu0 0
        %504 = vmatprep.subr.bf16.mxu0 0
        %505 = vmatpush1.bf16.msra.mxu0 0
        %506 = vmatprep.subr.bf16.mxu0 0
        %507 = vmatpush1.bf16.msra.mxu0 0
        %508 = vmatprep.subr.bf16.mxu0 0
        %509 = vmatpush1.bf16.msra.mxu0 0
        %510 = vmatprep.subr.bf16.mxu0 0
        %511 = vmatpush1.bf16.msra.mxu0 0
        %512 = vmatprep.subr.bf16.mxu0 0
        %513 = vmatpush1.bf16.msra.mxu0 0
        %514 = vmatprep.subr.bf16.mxu0 0
        %515 = vmatpush1.bf16.msra.mxu0 0
        %516 = vmatprep.subr.bf16.mxu0 0
        %517 = vmatpush1.bf16.msra.mxu0 0
        %518 = vmatprep.subr.bf16.mxu0 0
        %519 = vmatpush1.bf16.msra.mxu0 0
        %520 = vmatprep.subr.bf16.mxu0 0
        %521 = vmatpush1.bf16.msra.mxu0 0
        %522 = vmatprep.subr.bf16.mxu0 0
        %523 = vmatpush1.bf16.msra.mxu0 0
        %524 = vmatprep.mubr.bf16.mxu0 0
        %525 = vmatmul.mubr.bf16.gmra.mrb[0].mxu0 %v490
        %v526 = vpop.f32.mrb[0].mxu0
        %v527 = vadd.f32 %v376, %v526
        %v528 = vpop.f32.mrb[0].mxu0
        %v529 = vpop.f32.mrb[0].mxu0
        %v530 = vadd.f32 %v376, %v529
        %v531 = vpop.f32.mrb[0].mxu0
        %532 = vdwg.mxu0
        %v533 = vmax.f32 %v527, 0.0
        %v534 = vmax.f32 %v530, 0.0
        %v535 = vmax.f32 %v485, %v533
        %v536 = vmax.f32 %v486, %v534
        %537 = vrot.lane.b32.xlu0 %v365, 32
        %v538 = vpop.permute.xlu0 %537
        %v540 = vsel %vm314, %v538, 0
        %542 = vmatprep.subr.bf16.mxu0 0
        %543 = vmatpush1.bf16.msra.mxu0 %v386
        %544 = vmatprep.subr.bf16.mxu0 0
        %545 = vmatpush1.bf16.msra.mxu0 %v387
        %546 = vmatprep.subr.bf16.mxu0 0
        %547 = vmatpush1.bf16.msra.mxu0 0
        %548 = vmatprep.subr.bf16.mxu0 0
        %549 = vmatpush1.bf16.msra.mxu0 0
        %550 = vmatprep.subr.bf16.mxu0 0
        %551 = vmatpush1.bf16.msra.mxu0 0
        %552 = vmatprep.subr.bf16.mxu0 0
        %553 = vmatpush1.bf16.msra.mxu0 0
        %554 = vmatprep.subr.bf16.mxu0 0
        %555 = vmatpush1.bf16.msra.mxu0 0
        %556 = vmatprep.subr.bf16.mxu0 0
        %557 = vmatpush1.bf16.msra.mxu0 0
        %558 = vmatprep.subr.bf16.mxu0 0
        %559 = vmatpush1.bf16.msra.mxu0 0
        %560 = vmatprep.subr.bf16.mxu0 0
        %561 = vmatpush1.bf16.msra.mxu0 0
        %562 = vmatprep.subr.bf16.mxu0 0
        %563 = vmatpush1.bf16.msra.mxu0 0
        %564 = vmatprep.subr.bf16.mxu0 0
        %565 = vmatpush1.bf16.msra.mxu0 0
        %566 = vmatprep.subr.bf16.mxu0 0
        %567 = vmatpush1.bf16.msra.mxu0 0
        %568 = vmatprep.subr.bf16.mxu0 0
        %569 = vmatpush1.bf16.msra.mxu0 0
        %570 = vmatprep.subr.bf16.mxu0 0
        %571 = vmatpush1.bf16.msra.mxu0 0
        %572 = vmatprep.subr.bf16.mxu0 0
        %573 = vmatpush1.bf16.msra.mxu0 0
        %574 = vmatprep.mubr.bf16.mxu0 0
        %575 = vmatmul.mubr.bf16.gmra.mrb[0].mxu0 %v540
        %v576 = vpop.f32.mrb[0].mxu0
        %v577 = vadd.f32 %v376, %v576
        %v578 = vpop.f32.mrb[0].mxu0
        %v579 = vpop.f32.mrb[0].mxu0
        %v580 = vadd.f32 %v376, %v579
        %v581 = vpop.f32.mrb[0].mxu0
        %582 = vdwg.mxu0
        %v583 = vmax.f32 %v577, 0.0
        %v584 = vmax.f32 %v580, 0.0
        %v585 = vmax.f32 %v535, %v583
        %v586 = vmax.f32 %v536, %v584
        %v588 = vsel %vm314, %v366, 0
        %590 = vmatprep.subr.bf16.mxu0 0
        %591 = vmatpush1.bf16.msra.mxu0 %v386
        %592 = vmatprep.subr.bf16.mxu0 0
        %593 = vmatpush1.bf16.msra.mxu0 %v387
        %594 = vmatprep.subr.bf16.mxu0 0
        %595 = vmatpush1.bf16.msra.mxu0 0
        %596 = vmatprep.subr.bf16.mxu0 0
        %597 = vmatpush1.bf16.msra.mxu0 0
        %598 = vmatprep.subr.bf16.mxu0 0
        %599 = vmatpush1.bf16.msra.mxu0 0
        %600 = vmatprep.subr.bf16.mxu0 0
        %601 = vmatpush1.bf16.msra.mxu0 0
        %602 = vmatprep.subr.bf16.mxu0 0
        %603 = vmatpush1.bf16.msra.mxu0 0
        %604 = vmatprep.subr.bf16.mxu0 0
        %605 = vmatpush1.bf16.msra.mxu0 0
        %606 = vmatprep.subr.bf16.mxu0 0
        %607 = vmatpush1.bf16.msra.mxu0 0
        %608 = vmatprep.subr.bf16.mxu0 0
        %609 = vmatpush1.bf16.msra.mxu0 0
        %610 = vmatprep.subr.bf16.mxu0 0
        %611 = vmatpush1.bf16.msra.mxu0 0
        %612 = vmatprep.subr.bf16.mxu0 0
        %613 = vmatpush1.bf16.msra.mxu0 0
        %614 = vmatprep.subr.bf16.mxu0 0
        %615 = vmatpush1.bf16.msra.mxu0 0
        %616 = vmatprep.subr.bf16.mxu0 0
        %617 = vmatpush1.bf16.msra.mxu0 0
        %618 = vmatprep.subr.bf16.mxu0 0
        %619 = vmatpush1.bf16.msra.mxu0 0
        %620 = vmatprep.subr.bf16.mxu0 0
        %621 = vmatpush1.bf16.msra.mxu0 0
        %622 = vmatprep.mubr.bf16.mxu0 0
        %623 = vmatmul.mubr.bf16.gmra.mrb[0].mxu0 %v588
        %v624 = vpop.f32.mrb[0].mxu0
        %v625 = vadd.f32 %v376, %v624
        %v626 = vpop.f32.mrb[0].mxu0
        %v627 = vpop.f32.mrb[0].mxu0
        %v628 = vadd.f32 %v376, %v627
        %v629 = vpop.f32.mrb[0].mxu0
        %630 = vdwg.mxu0
        %v631 = vmax.f32 %v625, 0.0
        %v632 = vmax.f32 %v628, 0.0
        %v633 = vmax.f32 %v585, %v631
        %v634 = vmax.f32 %v586, %v632
        %636 = vrot.lane.b32.xlu0 %v366, 96
        %v637 = vpop.permute.xlu0 %636
        %v639 = vsel %vm314, %v637, 0
        %641 = vmatprep.subr.bf16.mxu0 0
        %642 = vmatpush1.bf16.msra.mxu0 %v386
        %643 = vmatprep.subr.bf16.mxu0 0
        %644 = vmatpush1.bf16.msra.mxu0 %v387
        %645 = vmatprep.subr.bf16.mxu0 0
        %646 = vmatpush1.bf16.msra.mxu0 0
        %647 = vmatprep.subr.bf16.mxu0 0
        %648 = vmatpush1.bf16.msra.mxu0 0
        %649 = vmatprep.subr.bf16.mxu0 0
        %650 = vmatpush1.bf16.msra.mxu0 0
        %651 = vmatprep.subr.bf16.mxu0 0
        %652 = vmatpush1.bf16.msra.mxu0 0
        %653 = vmatprep.subr.bf16.mxu0 0
        %654 = vmatpush1.bf16.msra.mxu0 0
        %655 = vmatprep.subr.bf16.mxu0 0
        %656 = vmatpush1.bf16.msra.mxu0 0
        %657 = vmatprep.subr.bf16.mxu0 0
        %658 = vmatpush1.bf16.msra.mxu0 0
        %659 = vmatprep.subr.bf16.mxu0 0
        %660 = vmatpush1.bf16.msra.mxu0 0
        %661 = vmatprep.subr.bf16.mxu0 0
        %662 = vmatpush1.bf16.msra.mxu0 0
        %663 = vmatprep.subr.bf16.mxu0 0
        %664 = vmatpush1.bf16.msra.mxu0 0
        %665 = vmatprep.subr.bf16.mxu0 0
        %666 = vmatpush1.bf16.msra.mxu0 0
        %667 = vmatprep.subr.bf16.mxu0 0
        %668 = vmatpush1.bf16.msra.mxu0 0
        %669 = vmatprep.subr.bf16.mxu0 0
        %670 = vmatpush1.bf16.msra.mxu0 0
        %671 = vmatprep.subr.bf16.mxu0 0
        %672 = vmatpush1.bf16.msra.mxu0 0
        %673 = vmatprep.mubr.bf16.mxu0 0
        %674 = vmatmul.mubr.bf16.gmra.mrb[0].mxu0 %v639
        %v675 = vpop.f32.mrb[0].mxu0
        %v676 = vadd.f32 %v376, %v675
        %v677 = vpop.f32.mrb[0].mxu0
        %v678 = vpop.f32.mrb[0].mxu0
        %v679 = vadd.f32 %v376, %v678
        %v680 = vpop.f32.mrb[0].mxu0
        %681 = vdwg.mxu0
        %v682 = vmax.f32 %v676, 0.0
        %v683 = vmax.f32 %v679, 0.0
        %v684 = vmax.f32 %v633, %v682
        %v685 = vmax.f32 %v634, %v683
        %686 = vrot.lane.b32.xlu0 %v366, 64
        %v687 = vpop.permute.xlu0 %686
        %v689 = vsel %vm314, %v687, 0
        %691 = vmatprep.subr.bf16.mxu0 0
        %692 = vmatpush1.bf16.msra.mxu0 %v386
        %693 = vmatprep.subr.bf16.mxu0 0
        %694 = vmatpush1.bf16.msra.mxu0 %v387
        %695 = vmatprep.subr.bf16.mxu0 0
        %696 = vmatpush1.bf16.msra.mxu0 0
        %697 = vmatprep.subr.bf16.mxu0 0
        %698 = vmatpush1.bf16.msra.mxu0 0
        %699 = vmatprep.subr.bf16.mxu0 0
        %700 = vmatpush1.bf16.msra.mxu0 0
        %701 = vmatprep.subr.bf16.mxu0 0
        %702 = vmatpush1.bf16.msra.mxu0 0
        %703 = vmatprep.subr.bf16.mxu0 0
        %704 = vmatpush1.bf16.msra.mxu0 0
        %705 = vmatprep.subr.bf16.mxu0 0
        %706 = vmatpush1.bf16.msra.mxu0 0
        %707 = vmatprep.subr.bf16.mxu0 0
        %708 = vmatpush1.bf16.msra.mxu0 0
        %709 = vmatprep.subr.bf16.mxu0 0
        %710 = vmatpush1.bf16.msra.mxu0 0
        %711 = vmatprep.subr.bf16.mxu0 0
        %712 = vmatpush1.bf16.msra.mxu0 0
        %713 = vmatprep.subr.bf16.mxu0 0
        %714 = vmatpush1.bf16.msra.mxu0 0
        %715 = vmatprep.subr.bf16.mxu0 0
        %716 = vmatpush1.bf16.msra.mxu0 0
        %717 = vmatprep.subr.bf16.mxu0 0
        %718 = vmatpush1.bf16.msra.mxu0 0
        %719 = vmatprep.subr.bf16.mxu0 0
        %720 = vmatpush1.bf16.msra.mxu0 0
        %721 = vmatprep.subr.bf16.mxu0 0
        %722 = vmatpush1.bf16.msra.mxu0 0
        %723 = vmatprep.mubr.bf16.mxu0 0
        %724 = vmatmul.mubr.bf16.gmra.mrb[0].mxu0 %v689
        %v725 = vpop.f32.mrb[0].mxu0
        %v726 = vadd.f32 %v376, %v725
        %v727 = vpop.f32.mrb[0].mxu0
        %v728 = vpop.f32.mrb[0].mxu0
        %v729 = vadd.f32 %v376, %v728
        %v730 = vpop.f32.mrb[0].mxu0
        %731 = vdwg.mxu0
        %v732 = vmax.f32 %v726, 0.0
        %v733 = vmax.f32 %v729, 0.0
        %v734 = vmax.f32 %v684, %v732
        %v735 = vmax.f32 %v685, %v733
        %736 = vrot.lane.b32.xlu0 %v366, 32
        %v737 = vpop.permute.xlu0 %736
        %v739 = vsel %vm314, %v737, 0
        %741 = vmatprep.subr.bf16.mxu0 0
        %742 = vmatpush1.bf16.msra.mxu0 %v386
        %743 = vmatprep.subr.bf16.mxu0 0
        %744 = vmatpush1.bf16.msra.mxu0 %v387
        %745 = vmatprep.subr.bf16.mxu0 0
        %746 = vmatpush1.bf16.msra.mxu0 0
        %747 = vmatprep.subr.bf16.mxu0 0
        %748 = vmatpush1.bf16.msra.mxu0 0
        %749 = vmatprep.subr.bf16.mxu0 0
        %750 = vmatpush1.bf16.msra.mxu0 0
        %751 = vmatprep.subr.bf16.mxu0 0
        %752 = vmatpush1.bf16.msra.mxu0 0
        %753 = vmatprep.subr.bf16.mxu0 0
        %754 = vmatpush1.bf16.msra.mxu0 0
        %755 = vmatprep.subr.bf16.mxu0 0
        %756 = vmatpush1.bf16.msra.mxu0 0
        %757 = vmatprep.subr.bf16.mxu0 0
        %758 = vmatpush1.bf16.msra.mxu0 0
        %759 = vmatprep.subr.bf16.mxu0 0
        %760 = vmatpush1.bf16.msra.mxu0 0
        %761 = vmatprep.subr.bf16.mxu0 0
        %762 = vmatpush1.bf16.msra.mxu0 0
        %763 = vmatprep.subr.bf16.mxu0 0
        %764 = vmatpush1.bf16.msra.mxu0 0
        %765 = vmatprep.subr.bf16.mxu0 0
        %766 = vmatpush1.bf16.msra.mxu0 0
        %767 = vmatprep.subr.bf16.mxu0 0
        %768 = vmatpush1.bf16.msra.mxu0 0
        %769 = vmatprep.subr.bf16.mxu0 0
        %770 = vmatpush1.bf16.msra.mxu0 0
        %771 = vmatprep.subr.bf16.mxu0 0
        %772 = vmatpush1.bf16.msra.mxu0 0
        %773 = vmatprep.mubr.bf16.mxu0 0
        %774 = vmatmul.mubr.bf16.gmra.mrb[0].mxu0 %v739
        %v775 = vpop.f32.mrb[0].mxu0
        %v776 = vadd.f32 %v376, %v775
        %v777 = vpop.f32.mrb[0].mxu0
        %v778 = vpop.f32.mrb[0].mxu0
        %v779 = vadd.f32 %v376, %v778
        %v780 = vpop.f32.mrb[0].mxu0
        %781 = vdwg.mxu0
        %v782 = vmax.f32 %v776, 0.0
        %v783 = vmax.f32 %v779, 0.0
        %v784 = vmax.f32 %v734, %v782
        %v785 = vmax.f32 %v735, %v783
        %vm786 = vcmask 523264
        %787 = vst.msk [vmem:[%s271] sm:$0xff] %vm786, %v784
        %788 = vst.msk [vmem:[%s271 + $0x8] sm:$0xff] %vm786, %v785
        %s789 = sand.u32 %s141, 1
        %s790 = scalar_lea.sflag [#allocation4], %s789
        %s791 = sand.u32 %s141, 1
        %s792 = smul.addr %s791, 16
        %s793 = scalar_lea.vmem [#allocation8], %s792
        // Predicated region
        $region53: #{tpu_custom_call.1} parent=39 // pred_check
          %p794 = pneg %p151
        $region54: #{tpu_custom_call.1} parent=39 // pred_check_branch
          %796 = sbr.rel (%p794) target = $region56
        $region55: #{tpu_custom_call.1} parent=39 // pred_region
          %s797 = smul.u32 2, %s23
          %s799 = ssub.s32 256, 256
          %800 = vsyncadd %s790, %s799
          %s801 = smul.addr %s797, 128
          %s802 = scalar_lea.hbm %s5, %s801
          %s803 = sshll.u32 %s793, 4
          %s804 = int_to_ptr.vmem [resolvable:$true] %s803
          %809 = dma.vmem_to_hbm [thread:$0]  %s804, 256, %s802, %s790, 128, 128, 8
        $region56: #{tpu_custom_call.1} parent=39 // pred_fallthru
          _
      $region40: #{tpu_custom_call.1} parent=5 // pred_fallthru
        _
      %p810 = scmp.le.s32.totalorder 2, %s18
      // Predicated region
      $region57: #{tpu_custom_call.1} parent=5 // pred_check
        %p811 = pneg %p810
      $region58: #{tpu_custom_call.1} parent=5 // pred_check_branch
        %813 = sbr.rel (%p811) target = $region60
      $region59: #{tpu_custom_call.1} parent=5 // pred_region
        %s814 = ssub.s32 %s18, 2
        // Predicated region
        $region61: #{tpu_custom_call.1} parent=59 // pred_check
          %p815 = pneg %p157
        $region62: #{tpu_custom_call.1} parent=59 // pred_check_branch
          %817 = sbr.rel (%p815) target = $region64
        $region63: #{tpu_custom_call.1} parent=59 // pred_region
          %s818 = sand.u32 %s142, 1
          %s819 = scalar_lea.sflag [#allocation4], %s818
          %s820 = sand.u32 %s142, 1
          %s821 = smul.addr %s820, 16
          %s822 = scalar_lea.vmem [#allocation8], %s821
          %823 = dma.done %s819, 256
        $region64: #{tpu_custom_call.1} parent=59 // pred_fallthru
          _
      $region60: #{tpu_custom_call.1} parent=5 // pred_fallthru
        _
    $region6: #{tpu_custom_call.1} parent=1 // loop_footer
      %s22 = sadd.s32 1, %s18
    $region7: #{tpu_custom_call.1} parent=1 // loop_footer_branch
      %17 = sbr.rel target = $region3
    $region8: #{tpu_custom_call.1} parent=1 // loop_exit
      _
    %824 = vsyncpa [#allocation3], 1
    %s825 = scalar_lea.sflag [#allocation3], 1
    %826 = vsyncpa %s825, 1
    %827 = vsyncpa [#allocation6], 1
    %828 = vsyncpa [#allocation4], 1
    %s829 = scalar_lea.sflag [#allocation4], 1
    %830 = vsyncpa %s829, 1

</llo_original>
